<compile_context>
chip_gen: v5e
topology: v5e:2x2
jax: 0.10.0
libtpu: 0.0.40
codegen_flags: <defaults>
</compile_context>

<pallas_src>
import math
from functools import partial

import jax
import jax.numpy as jnp
from jax.experimental import pallas as pl
from jax.experimental.pallas import tpu as pltpu


# ----------------------------------------------------------------------------
# Weight construction (mirrors the PyTorch module __init__).
# ----------------------------------------------------------------------------
def gaussian_1d(kernel_size, sigma):
    """Normalized 1D Gaussian factor (the module's 2D weight == outer product)."""
    grid = jnp.arange(kernel_size, dtype=jnp.float32)
    mean = (kernel_size - 1) / 2.0
    g = (1.0 / (sigma * math.sqrt(2.0 * math.pi))) * jnp.exp(
        -(((grid - mean) / sigma) ** 2) / 2.0
    )
    return g / jnp.sum(g)


def gaussian_2d(channels, kernel_size, sigma, dim=2):
    """Replicates the PyTorch __init__ 2D weight exactly (for the reference)."""
    if isinstance(kernel_size, (int, float)):
        kernel_size = [int(kernel_size)] * dim
    if isinstance(sigma, (int, float)):
        sigma = [float(sigma)] * dim
    kernel = jnp.ones((), jnp.float32)
    grids = jnp.meshgrid(
        *[jnp.arange(s, dtype=jnp.float32) for s in kernel_size], indexing="ij"
    )
    for size, std, mgrid in zip(kernel_size, sigma, grids):
        mean = (size - 1) / 2.0
        kernel = kernel * (
            1.0 / (std * math.sqrt(2.0 * math.pi))
            * jnp.exp(-(((mgrid - mean) / std) ** 2) / 2.0)
        )
    kernel = kernel / jnp.sum(kernel)
    return jnp.broadcast_to(kernel[None, :, :], (channels,) + kernel.shape)


def _conv_toeplitz(w1d, in_len, pad):
    """Banded Toeplitz T with T[i, h] = w1d[h - i + pad] (0 outside the band).

    (T @ x)[i] = sum_k w1d[k] * x[i + k - pad] with implicit zero padding,
    i.e. 1D cross-correlation with `pad` zeros each side (== F.conv1d).
    Shape (out_len, in_len), out_len = in_len + 2*pad - K + 1.
    """
    K = w1d.shape[0]
    out_len = in_len + 2 * pad - K + 1
    i = jnp.arange(out_len, dtype=jnp.int32)[:, None]
    h = jnp.arange(in_len, dtype=jnp.int32)[None, :]
    k = h - i + pad
    valid = (k >= 0) & (k < K)
    return jnp.where(valid, w1d[jnp.clip(k, 0, K - 1)], 0.0).astype(jnp.float32)


# ----------------------------------------------------------------------------
# Pallas kernel.
# ----------------------------------------------------------------------------
def _gaussian_smoothing_kernel(x_ref, tv_ref, th_ref, o_ref):
    """One batch element per grid step; channels folded onto the lane axis.

    x_ref : (1, H, C*W)         input slab (NCHW repacked by the wrapper)
    tv_ref: (H_out, H)          vertical-pass Toeplitz (shared by all channels)
    th_ref: (C*W, C*W_out)      block-diagonal horizontal-pass Toeplitz
    o_ref : (1, H_out, C*W_out) lane-dense output slab
    """
    x = x_ref[0]                                                      # (H, C*W)
    # Vertical 1D Gaussian pass (zero padding absorbed into tv) on the MXU.
    z = jnp.dot(tv_ref[...], x, preferred_element_type=jnp.float32)   # (H_out, C*W)
    # Horizontal 1D Gaussian pass, per channel via the block-diagonal Toeplitz.
    z = jnp.dot(z, th_ref[...], preferred_element_type=jnp.float32)   # (H_out, C*W_out)
    o_ref[0] = z.astype(o_ref.dtype)


# TODO(synk): only the dim=2 (conv2d) path of the module is implemented; the
# dim=1/dim=3 (conv1d/conv3d) branches are not.
@partial(jax.jit, static_argnums=(1, 2, 3))
def gaussian_smoothing(x, kernel_size, sigma, padding):
    """Depthwise Gaussian blur, NCHW in / NCHW out (== module.forward)."""
    N, C, H, W = x.shape
    K = int(kernel_size)
    H_out = H + 2 * padding - K + 1
    W_out = W + 2 * padding - K + 1

    w1 = gaussian_1d(K, float(sigma))                        # (K,)
    tv = _conv_toeplitz(w1, H, padding)                      # (H_out, H)
    th = _conv_toeplitz(w1, W, padding).T                    # (W, W_out)
    # All channels share the same kernel -> fold channels onto lanes and do the
    # horizontal pass as one block-diagonal matmul.  (For very large C*W this
    # should become a per-channel einsum / channel-tiled grid instead.)
    th_blk = jnp.kron(jnp.eye(C, dtype=jnp.float32), th)     # (C*W, C*W_out)

    # Layout plumbing: (N, C, H, W) -> (N, H, C*W) so the kernel's last dim is
    # a lane-dense C*W slab (>=128 lanes for realistic C*W).
    xt = jnp.transpose(x, (0, 2, 1, 3)).reshape(N, H, C * W)

    out = pl.pallas_call(
        _gaussian_smoothing_kernel,
        out_shape=jax.ShapeDtypeStruct((N, H_out, C * W_out), x.dtype),
        grid_spec=pltpu.PrefetchScalarGridSpec(
            num_scalar_prefetch=0,
            grid=(N,),   # fat blocks: one whole (H, C*W) slab per grid step
            in_specs=[
                pl.BlockSpec((1, H, C * W), lambda n: (n, 0, 0)),
                pl.BlockSpec((H_out, H), lambda n: (0, 0)),
                pl.BlockSpec((C * W, C * W_out), lambda n: (0, 0)),
            ],
            out_specs=pl.BlockSpec((1, H_out, C * W_out), lambda n: (n, 0, 0)),
        ),
        compiler_params=pltpu.CompilerParams(
            # >= 2 parallel steps so v7x's two TensorCores both get work.
            dimension_semantics=("parallel",),
            # NOTE: for large planes, raise vmem_limit_bytes and strip-tile H
            # with a (K-1)-row halo; unnecessary at these block sizes.
        ),
    )(xt, tv, th_blk)

    # (N, H_out, C*W_out) -> (N, C, H_out, W_out)
    return jnp.transpose(out.reshape(N, H_out, C, W_out), (0, 2, 1, 3))


# ----------------------------------------------------------------------------
# Pure-JAX reference (matches F.conv2d, groups=C).
# ----------------------------------------------------------------------------
def gaussian_smoothing_ref(x, weight2d, padding):
    C = x.shape[1]
    w = weight2d[:, None, :, :]                              # (C, 1, K, K)
    return jax.lax.conv_general_dilated(
        x, w,
        window_strides=(1, 1),
        padding=[(padding, padding), (padding, padding)],
        dimension_numbers=("NCHW", "OIHW", "NCHW"),
        feature_group_count=C,
        precision=jax.lax.Precision.HIGHEST,
    )


if __name__ == "__main__":
    # Module config: channels=4, kernel_size=3, sigma=1.0, padding=1.
    channels, kernel_size, sigma, padding = 4, 3, 1.0, 1

    key = jax.random.PRNGKey(0)
    x = jax.random.normal(key, (2, channels, 16, 16), dtype=jnp.float32)

    out = jax.block_until_ready(gaussian_smoothing(x, kernel_size, sigma, padding))

    weight2d = gaussian_2d(channels, kernel_size, sigma)
    ref = jax.block_until_ready(gaussian_smoothing_ref(x, weight2d, padding))

    assert out.shape == ref.shape, (out.shape, ref.shape)
    err = float(jnp.max(jnp.abs(out - ref)))
    # 1e-4: headroom for MXU f32 accumulation-order differences vs the XLA conv.
    assert err < 1e-4, err
    print("KERNEL_OK")
</pallas_src>

<mosaic_0001>
module attributes {stable_mosaic.version = 11 : i64} {
  func.func @_gaussian_smoothing_kernel(%arg0: i32, %arg1: memref<1x16x64xf32, #tpu.memory_space<vmem>>, %arg2: memref<16x16xf32, #tpu.memory_space<vmem>>, %arg3: memref<64x64xf32, #tpu.memory_space<vmem>>, %arg4: memref<1x16x64xf32, #tpu.memory_space<vmem>>) attributes {dimension_semantics = [#tpu.dimension_semantics<parallel>], iteration_bounds = array<i64: 2>, scalar_prefetch = 0 : i64, scratch_operands = 0 : i64, tpu.core_type = #tpu.core_type<tc>, window_params = [{transform_indices = @transform_0, window_bounds = array<i64: 1, 16, 64>}, {pipeline_mode = #tpu.pipeline_mode<synchronous>, transform_indices = @transform_1, window_bounds = array<i64: 16, 16>}, {pipeline_mode = #tpu.pipeline_mode<synchronous>, transform_indices = @transform_2, window_bounds = array<i64: 64, 64>}, {transform_indices = @transform_3, window_bounds = array<i64: 1, 16, 64>}]} {
    %c0 = arith.constant 0 : index
    %c0_0 = arith.constant 0 : index
    %c0_1 = arith.constant 0 : index
    %0 = vector.load %arg1[%c0, %c0_0, %c0_1] : memref<1x16x64xf32, #tpu.memory_space<vmem>>, vector<1x16x64xf32>
    %1 = vector.shape_cast %0 : vector<1x16x64xf32> to vector<16x64xf32>
    %c0_2 = arith.constant 0 : index
    %c0_3 = arith.constant 0 : index
    %2 = vector.load %arg2[%c0_2, %c0_3] : memref<16x16xf32, #tpu.memory_space<vmem>>, vector<16x16xf32>
    %cst = arith.constant dense<0.000000e+00> : vector<16x64xf32>
    %3 = tpu.matmul %2, %1, %cst {dimension_numbers = #tpu.dot_dimension_numbers<[1], [0], [0], [1], [0, 0, 1, 1], [], []>} : vector<16x16xf32>, vector<16x64xf32>, vector<16x64xf32> -> vector<16x64xf32>
    %c0_4 = arith.constant 0 : index
    %c0_5 = arith.constant 0 : index
    %4 = vector.load %arg3[%c0_4, %c0_5] : memref<64x64xf32, #tpu.memory_space<vmem>>, vector<64x64xf32>
    %cst_6 = arith.constant dense<0.000000e+00> : vector<16x64xf32>
    %5 = tpu.matmul %3, %4, %cst_6 {dimension_numbers = #tpu.dot_dimension_numbers<[1], [0], [0], [1], [0, 0, 1, 1], [], []>} : vector<16x64xf32>, vector<64x64xf32>, vector<16x64xf32> -> vector<16x64xf32>
    %c0_7 = arith.constant 0 : index
    %c0_8 = arith.constant 0 : index
    %c0_9 = arith.constant 0 : index
    %6 = vector.load %arg4[%c0_7, %c0_8, %c0_9] : memref<1x16x64xf32, #tpu.memory_space<vmem>>, vector<1x16x64xf32>
    %7 = vector.shape_cast %6 : vector<1x16x64xf32> to vector<16x64xf32>
    %8 = vector.shape_cast %5 : vector<16x64xf32> to vector<1x16x64xf32>
    tpu.vector_store %arg4[%c0_7, %c0_8, %c0_9], %8 {strides = array<i32>} : memref<1x16x64xf32, #tpu.memory_space<vmem>>, vector<1x16x64xf32>,
    return
  }
  func.func @transform_0(%arg0: i32) -> (i32, i32, i32) {
    %c0_i32 = arith.constant 0 : i32
    %c0_i32_0 = arith.constant 0 : i32
    %c0_i32_1 = arith.constant 0 : i32
    return %arg0, %c0_i32, %c0_i32_0 : i32, i32, i32
  }
  func.func @transform_1(%arg0: i32) -> (i32, i32) {
    %c0_i32 = arith.constant 0 : i32
    %c0_i32_0 = arith.constant 0 : i32
    %c0_i32_1 = arith.constant 0 : i32
    return %c0_i32, %c0_i32_0 : i32, i32
  }
  func.func @transform_2(%arg0: i32) -> (i32, i32) {
    %c0_i32 = arith.constant 0 : i32
    %c0_i32_0 = arith.constant 0 : i32
    %c0_i32_1 = arith.constant 0 : i32
    return %c0_i32, %c0_i32_0 : i32, i32
  }
  func.func @transform_3(%arg0: i32) -> (i32, i32, i32) {
    %c0_i32 = arith.constant 0 : i32
    %c0_i32_0 = arith.constant 0 : i32
    %c0_i32_1 = arith.constant 0 : i32
    return %arg0, %c0_i32, %c0_i32_0 : i32, i32, i32
  }
}

</mosaic_0001>

<llo_original>
// kernel: gaussian_smoothing.1
$region0: #{gaussian_smoothing.1}
  #allocation0 [shape = 'u32[]', space=smem, size = 0x4, offset = 0x4, fixed_abs, tag = 'smem constant byte address 0x4 - core index']
  #allocation1 [shape = 'u32[72,128]{1,0:T(1,128)}', space=vmem, size = 0x9000, scoped, tag = 'internal scratch']
  %s0 = inlined_call_operand.vmem [shape: f32[2,16,64], index: 0, kind: input, shape index: {}]
  %s1 = inlined_call_operand.vmem [shape: f32[16,16], index: 1, kind: input, shape index: {}]
  %s2 = inlined_call_operand.vmem [shape: f32[64,64], index: 2, kind: input, shape index: {}]
  %s3 = inlined_call_operand.vmem [shape: f32[2,16,64], index: 3, kind: output, shape index: {}]
  %s4 = sld [smem:[#allocation0]]
  $region45: #{gaussian_smoothing.1} parent=0
    _
  %s6 = ssub.s32 1, %s4
  %s7 = scalar_select 0, %s6, %s4
  loop: start=0, step=1, limit=4
  $region2: #{gaussian_smoothing.1} parent=0 // loop_pre_header
    _
  $region3: #{gaussian_smoothing.1} parent=0 // loop_header
    %s9 = sphi 0, %s13
    %p10 = scmp.ge.s32.totalorder %s9, 4
    %s19 = sphi 0, %s21
    %s22 = sphi 0, %s19
    %s23 = sphi 0, %s22
    %s39 = sphi 0, %s23
    %s43 = sphi 0, %s43
    %s45 = sphi 0, %s43
    %s46 = sphi 0, %s45
    %s60 = sphi 0, %s46
    %s64 = sphi 0, %s64
    %s66 = sphi 0, %s64
    %s67 = sphi 0, %s66
    %s81 = sphi 0, %s67
    %s87 = sphi 0, %s89
    %s90 = sphi 0, %s87
    %s91 = sphi 0, %s90
    %s107 = sphi 0, %s91
  $region4: #{gaussian_smoothing.1} parent=0 // loop_header_branch
    %12 = sbr.rel (%p10) target = $region8
  $region5: #{gaussian_smoothing.1} parent=0 // loop_body
    %s14 = ssub.s32 %s9, 1
    %s15 = ssub.s32 %s9, 2
    %s16 = sadd.s32 %s9, 1
    %s17 = ssub.s32 %s9, %s16
    %p18 = scmp.eq.s32.totalorder %s17, 0
    %s20 = sadd.s32 %s19, 1
    %s21 = scalar_select %p18, %s19, %s20
    %p24 = pneg %p18
    %p25 = scmp.eq.s32.totalorder %s9, 1
    %p26 = por %p24, %p25
    %p27 = scmp.ne.s32.totalorder %s19, %s22
    %p28 = scmp.eq.s32.totalorder %s9, 0
    %p29 = por %p27, %p28
    %p30 = scmp.ne.s32.totalorder %s19, %s22
    %p31 = scmp.eq.s32.totalorder %s14, 1
    %p32 = por %p30, %p31
    %p33 = scmp.ne.s32.totalorder %s22, %s23
    %p34 = scmp.eq.s32.totalorder %s14, 0
    %p35 = por %p33, %p34
    %p36 = scmp.ne.s32.totalorder %s22, %s23
    %p37 = scmp.eq.s32.totalorder %s15, 1
    %p38 = por %p36, %p37
    %p40 = scmp.ne.s32.totalorder %s23, %s39
    %p41 = scmp.eq.s32.totalorder %s15, 0
    %p42 = por %p40, %p41
    %s44 = sadd.s32 %s43, 1
    %p47 = scmp.eq.s32.totalorder %s9, 1
    %p48 = scmp.ne.s32.totalorder %s43, %s45
    %p49 = scmp.eq.s32.totalorder %s9, 0
    %p50 = por %p48, %p49
    %p51 = scmp.ne.s32.totalorder %s43, %s45
    %p52 = scmp.eq.s32.totalorder %s14, 1
    %p53 = por %p51, %p52
    %p54 = scmp.ne.s32.totalorder %s45, %s46
    %p55 = scmp.eq.s32.totalorder %s14, 0
    %p56 = por %p54, %p55
    %p57 = scmp.ne.s32.totalorder %s45, %s46
    %p58 = scmp.eq.s32.totalorder %s15, 1
    %p59 = por %p57, %p58
    %p61 = scmp.ne.s32.totalorder %s46, %s60
    %p62 = scmp.eq.s32.totalorder %s15, 0
    %p63 = por %p61, %p62
    %s65 = sadd.s32 %s64, 1
    %p68 = scmp.eq.s32.totalorder %s9, 1
    %p69 = scmp.ne.s32.totalorder %s64, %s66
    %p70 = scmp.eq.s32.totalorder %s9, 0
    %p71 = por %p69, %p70
    %p72 = scmp.ne.s32.totalorder %s64, %s66
    %p73 = scmp.eq.s32.totalorder %s14, 1
    %p74 = por %p72, %p73
    %p75 = scmp.ne.s32.totalorder %s66, %s67
    %p76 = scmp.eq.s32.totalorder %s14, 0
    %p77 = por %p75, %p76
    %p78 = scmp.ne.s32.totalorder %s66, %s67
    %p79 = scmp.eq.s32.totalorder %s15, 1
    %p80 = por %p78, %p79
    %p82 = scmp.ne.s32.totalorder %s67, %s81
    %p83 = scmp.eq.s32.totalorder %s15, 0
    %p84 = por %p82, %p83
    %s85 = ssub.s32 %s9, %s16
    %p86 = scmp.eq.s32.totalorder %s85, 0
    %s88 = sadd.s32 %s87, 1
    %s89 = scalar_select %p86, %s87, %s88
    %p92 = pneg %p86
    %p93 = scmp.eq.s32.totalorder %s9, 1
    %p94 = por %p92, %p93
    %p95 = scmp.ne.s32.totalorder %s87, %s90
    %p96 = scmp.eq.s32.totalorder %s9, 0
    %p97 = por %p95, %p96
    %p98 = scmp.ne.s32.totalorder %s87, %s90
    %p99 = scmp.eq.s32.totalorder %s14, 1
    %p100 = por %p98, %p99
    %p101 = scmp.ne.s32.totalorder %s90, %s91
    %p102 = scmp.eq.s32.totalorder %s14, 0
    %p103 = por %p101, %p102
    %p104 = scmp.ne.s32.totalorder %s90, %s91
    %p105 = scmp.eq.s32.totalorder %s15, 1
    %p106 = por %p104, %p105
    %p108 = scmp.ne.s32.totalorder %s91, %s107
    %p109 = scmp.eq.s32.totalorder %s15, 0
    %p110 = por %p108, %p109
    %p111 = scmp.le.s32.totalorder 1, %s9
    %p112 = scmp.lt.s32.totalorder %s9, 3
    %p113 = pnand %p111, %p112
    %p114 = pneg %p113
    // Predicated region
    $region9: #{gaussian_smoothing.1} parent=5 // pred_check
      _
    $region10: #{gaussian_smoothing.1} parent=5 // pred_check_branch
      %116 = sbr.rel (%p113) target = $region12
    $region11: #{gaussian_smoothing.1} parent=5 // pred_region
      %s117 = ssub.s32 %s9, 1
      // Predicated region
      $region13: #{gaussian_smoothing.1} parent=11 // pred_check
        %p118 = pneg %p56
      $region14: #{gaussian_smoothing.1} parent=11 // pred_check_branch
        %120 = sbr.rel (%p118) target = $region16
      $region15: #{gaussian_smoothing.1} parent=11 // pred_region
        _
      $region16: #{gaussian_smoothing.1} parent=11 // pred_fallthru
        _
      // Predicated region
      $region17: #{gaussian_smoothing.1} parent=11 // pred_check
        %p121 = pneg %p77
      $region18: #{gaussian_smoothing.1} parent=11 // pred_check_branch
        %123 = sbr.rel (%p121) target = $region20
      $region19: #{gaussian_smoothing.1} parent=11 // pred_region
        _
      $region20: #{gaussian_smoothing.1} parent=11 // pred_fallthru
        _
    $region12: #{gaussian_smoothing.1} parent=5 // pred_fallthru
      _
    %p124 = scmp.lt.s32.totalorder %s9, 2
    // Predicated region
    $region21: #{gaussian_smoothing.1} parent=5 // pred_check
      %p125 = pneg %p124
    $region22: #{gaussian_smoothing.1} parent=5 // pred_check_branch
      %127 = sbr.rel (%p125) target = $region24
    $region23: #{gaussian_smoothing.1} parent=5 // pred_region
      // Predicated region
      $region25: #{gaussian_smoothing.1} parent=23 // pred_check
        %p128 = pneg %p29
      $region26: #{gaussian_smoothing.1} parent=23 // pred_check_branch
        %130 = sbr.rel (%p128) target = $region28
      $region27: #{gaussian_smoothing.1} parent=23 // pred_region
        %p131 = scmp.lt.s32.totalorder %s9, 1
        %s132 = scalar_select %p131, %s9, 1
        %s133 = smul.addr %s132, 2
        %s134 = smul.addr %s133, 8
        %s135 = scalar_lea.vmem %s0, %s134
      $region28: #{gaussian_smoothing.1} parent=23 // pred_fallthru
        _
    $region24: #{gaussian_smoothing.1} parent=5 // pred_fallthru
      _
    %p136 = scmp.le.s32.totalorder 1, %s9
    %p137 = scmp.lt.s32.totalorder %s9, 3
    %p138 = pnand %p136, %p137
    %p139 = pneg %p138
    // Predicated region
    $region29: #{gaussian_smoothing.1} parent=5 // pred_check
      _
    $region30: #{gaussian_smoothing.1} parent=5 // pred_check_branch
      %141 = sbr.rel (%p138) target = $region32
    $region31: #{gaussian_smoothing.1} parent=5 // pred_region
      %s142 = ssub.s32 %s9, 1
      %p143 = scmp.lt.s32.totalorder %s14, 1
      %s144 = scalar_select %p143, %s14, 1
      %s145 = smul.addr %s144, 2
      %s146 = smul.addr %s145, 8
      %s147 = scalar_lea.vmem %s0, %s146
      %p148 = pneg %p35
      %p149 = pneg %p32
      %p150 = pneg %p56
      %p151 = pneg %p53
      %p152 = pneg %p77
      %p153 = pneg %p74
      %p154 = pneg %p103
      %p155 = pneg %p100
      %p156 = scmp.lt.s32.totalorder %s14, 1
      %s157 = scalar_select %p156, %s14, 1
      %s158 = smul.addr %s157, 2
      %s159 = smul.addr %s158, 8
      %s160 = scalar_lea.vmem %s3, %s159
      %p161 = scmp.lt.s32.totalorder %s14, 1
      %s162 = scalar_select %p161, %s14, 1
      %s163 = smul.addr %s162, 2
      %s164 = smul.addr %s163, 8
      %s165 = scalar_lea.vmem %s0, %s164
      %p166 = scmp.lt.s32.totalorder %s14, 1
      %s167 = scalar_select %p166, %s14, 1
      %s168 = smul.addr %s167, 2
      %s169 = smul.addr %s168, 8
      %s170 = scalar_lea.vmem %s3, %s169
      %v171 = vld [vmem:[%s165] sm:$0xff]
      %v172 = vld [vmem:[%s165 + $0x8] sm:$0xff]
      %v173 = vld [vmem:[%s1] sm:$0xff]
      %v174 = vld [vmem:[%s1 + $0x8] sm:$0xff]
      %vm175 = vcmask 130048
      %v177 = vsel %vm175, %v173, 0
      %v180 = vsel %vm175, %v174, 0
      %182 = vmatpush.msra.mxu0 0.0
      %183 = vmatpush.msra.mxu0 0.0
      %184 = vmatpush.msra.mxu0 0.0
      %185 = vmatpush.msra.mxu0 0.0
      %186 = vmatpush.msra.mxu0 0.0
      %187 = vmatpush.msra.mxu0 0.0
      %188 = vmatpush.msra.mxu0 0.0
      %189 = vmatpush.msra.mxu0 0.0
      %190 = vmatpush.msra.mxu0 0.0
      %191 = vmatpush.msra.mxu0 0.0
      %192 = vmatpush.msra.mxu0 0.0
      %193 = vmatpush.msra.mxu0 0.0
      %194 = vmatpush.msra.mxu0 0.0
      %195 = vmatpush.msra.mxu0 0.0
      %196 = vmatpush.msra.mxu0 %v172
      %197 = vmatpush.msra.mxu0 %v171
      %198 = vmatmul.f32.gmra.mxu0 %v177
      %v199 = vpop.f32.mrf.mxu0
      %v200 = vadd.f32 0.0, %v199
      %201 = vmatmul.f32.gmra.mxu0 %v180
      %v202 = vpop.f32.mrf.mxu0
      %v203 = vadd.f32 0.0, %v202
      %204 = vdwg.mxu0
      %v205 = vld [vmem:[%s2] sm:$0xff]
      %v206 = vld [vmem:[%s2 + $0x8] sm:$0xff]
      %v207 = vld [vmem:[%s2 + $0x10] sm:$0xff]
      %v208 = vld [vmem:[%s2 + $0x18] sm:$0xff]
      %v209 = vld [vmem:[%s2 + $0x20] sm:$0xff]
      %v210 = vld [vmem:[%s2 + $0x28] sm:$0xff]
      %v211 = vld [vmem:[%s2 + $0x30] sm:$0xff]
      %v212 = vld [vmem:[%s2 + $0x38] sm:$0xff]
      %vm213 = vcmask 523264
      %v215 = vsel %vm213, %v200, 0
      %v218 = vsel %vm213, %v203, 0
      %220 = vmatpush.msra.mxu0 0.0
      %221 = vmatpush.msra.mxu0 0.0
      %222 = vmatpush.msra.mxu0 0.0
      %223 = vmatpush.msra.mxu0 0.0
      %224 = vmatpush.msra.mxu0 0.0
      %225 = vmatpush.msra.mxu0 0.0
      %226 = vmatpush.msra.mxu0 0.0
      %227 = vmatpush.msra.mxu0 0.0
      %228 = vmatpush.msra.mxu0 %v212
      %229 = vmatpush.msra.mxu0 %v211
      %230 = vmatpush.msra.mxu0 %v210
      %231 = vmatpush.msra.mxu0 %v209
      %232 = vmatpush.msra.mxu0 %v208
      %233 = vmatpush.msra.mxu0 %v207
      %234 = vmatpush.msra.mxu0 %v206
      %235 = vmatpush.msra.mxu0 %v205
      %236 = vmatmul.f32.gmra.mxu0 %v215
      %v237 = vpop.f32.mrf.mxu0
      %v238 = vadd.f32 0.0, %v237
      %239 = vmatmul.f32.gmra.mxu0 %v218
      %v240 = vpop.f32.mrf.mxu0
      %v241 = vadd.f32 0.0, %v240
      %242 = vdwg.mxu0
      %243 = vst.msk [vmem:[%s170] sm:$0xff] %vm213, %v238
      %244 = vst.msk [vmem:[%s170 + $0x8] sm:$0xff] %vm213, %v241
      %p245 = scmp.lt.s32.totalorder %s14, 1
      %s246 = scalar_select %p245, %s14, 1
      %s247 = smul.addr %s246, 2
      %s248 = smul.addr %s247, 8
      %s249 = scalar_lea.vmem %s3, %s248
      // Predicated region
      $region33: #{gaussian_smoothing.1} parent=31 // pred_check
        %p250 = pneg %p100
      $region34: #{gaussian_smoothing.1} parent=31 // pred_check_branch
        %252 = sbr.rel (%p250) target = $region36
      $region35: #{gaussian_smoothing.1} parent=31 // pred_region
        _
      $region36: #{gaussian_smoothing.1} parent=31 // pred_fallthru
        _
    $region32: #{gaussian_smoothing.1} parent=5 // pred_fallthru
      _
    %p253 = scmp.le.s32.totalorder 2, %s9
    // Predicated region
    $region37: #{gaussian_smoothing.1} parent=5 // pred_check
      %p254 = pneg %p253
    $region38: #{gaussian_smoothing.1} parent=5 // pred_check_branch
      %256 = sbr.rel (%p254) target = $region40
    $region39: #{gaussian_smoothing.1} parent=5 // pred_region
      %s257 = ssub.s32 %s9, 2
      // Predicated region
      $region41: #{gaussian_smoothing.1} parent=39 // pred_check
        %p258 = pneg %p106
      $region42: #{gaussian_smoothing.1} parent=39 // pred_check_branch
        %260 = sbr.rel (%p258) target = $region44
      $region43: #{gaussian_smoothing.1} parent=39 // pred_region
        %p261 = scmp.lt.s32.totalorder %s15, 1
        %s262 = scalar_select %p261, %s15, 1
        %s263 = smul.addr %s262, 2
        %s264 = smul.addr %s263, 8
        %s265 = scalar_lea.vmem %s3, %s264
      $region44: #{gaussian_smoothing.1} parent=39 // pred_fallthru
        _
    $region40: #{gaussian_smoothing.1} parent=5 // pred_fallthru
      _
  $region6: #{gaussian_smoothing.1} parent=0 // loop_footer
    %s13 = sadd.s32 1, %s9
  $region7: #{gaussian_smoothing.1} parent=0 // loop_footer_branch
    %8 = sbr.rel target = $region3
  $region8: #{gaussian_smoothing.1} parent=0 // loop_exit
    _

</llo_original>
